<compile_context>
chip_gen: v7x
topology: tpu7x:2x2x1
jax: 0.10.0
libtpu: 0.0.40
codegen_flags: <defaults>
</compile_context>

<pallas_src>
import functools

import jax
import jax.numpy as jnp
from jax.experimental import pallas as pl
from jax.experimental.pallas import tpu as pltpu

EPS = 1e-5  # PyTorch GroupNorm default eps


# ----------------------- fused GroupNorm + Conv3x3 + ReLU --------------------
def _gn_conv_relu_kernel(x_ref, a_ref, gamma_ref, beta_ref, w_ref, b_ref, o_ref,
                         *, H, W, KH, KW, compute_dtype, eps):
    # x_ref block : (1, Cin, H*W)        raw input, channels on sublanes
    # a_ref       : (Cin, Cin)           block-diag group-average matrix (1/(cg*HW))
    # gamma/beta  : (Cin, 1)             GroupNorm affine (fp32)
    # w_ref       : (Cout, KH*KW*Cin)    im2col conv weights (compute_dtype)
    # b_ref       : (Cout, 1)            conv bias (fp32)
    # o_ref block : (1, Cout, H*W)       lane-dense NCHW output
    cin = x_ref.shape[1]
    HW = H * W
    r = (KH - 1) // 2
    # zero halo big enough for the largest tap shift, rounded up to a lane multiple
    pad = ((r * (W + 1) + 127) // 128) * 128

    # ---------------- GroupNorm (fused, one-pass fp32 stats) ----------------
    x = x_ref[0].astype(jnp.float32)                         # (Cin, HW)
    s1 = jnp.sum(x, axis=1, keepdims=True)                   # (Cin, 1)
    s2 = jnp.sum(x * x, axis=1, keepdims=True)               # (Cin, 1)
    lane = jax.lax.broadcasted_iota(jnp.int32, (1, 128), 1)
    s12 = jnp.where(lane == 0, s1, 0.0) + jnp.where(lane == 1, s2, 0.0)  # (Cin, 128)
    # One tiny matmul both reduces the per-channel sums within each group and
    # broadcasts the group mean / E[x^2] back onto every channel (no reshapes).
    g = jnp.dot(a_ref[...], s12, preferred_element_type=jnp.float32)    # (Cin, 128)
    mean_c = g[:, 0:1]                                        # (Cin, 1)
    ex2_c = g[:, 1:2]                                         # (Cin, 1)
    rstd_c = jax.lax.rsqrt(ex2_c - mean_c * mean_c + eps)
    scale = rstd_c * gamma_ref[...]                           # (Cin, 1)
    shift = beta_ref[...] - mean_c * scale                    # (Cin, 1)
    xn = (x * scale + shift).astype(compute_dtype)            # (Cin, HW)

    # --------------- im2col on the flattened spatial axis -------------------
    zpad = jnp.zeros((cin, pad), compute_dtype)
    xp = jnp.concatenate([zpad, xn, zpad], axis=1)            # (Cin, HW + 2*pad)
    col = jax.lax.broadcasted_iota(jnp.int32, (1, HW), 1) % W  # column index per lane

    taps = []
    for dh in range(-r, r + 1):
        for dw in range(-r, r + 1):
            s = dh * W + dw
            tap = jax.lax.slice_in_dim(xp, pad + s, pad + s + HW, axis=1)  # (Cin, HW)
            # Zero the columns where the tap crosses the left/right image border;
            # the top/bottom border is already zero via the lane halo above.
            if dw > 0:
                tap = jnp.where(col < (W - dw), tap, 0.0)
            elif dw < 0:
                tap = jnp.where(col >= (-dw), tap, 0.0)
            taps.append(tap)
    patches = jnp.concatenate(taps, axis=0)                   # (KH*KW*Cin, HW)

    # ---------- single MXU matmul (K = KH*KW*Cin) + bias + ReLU -------------
    acc = jnp.dot(w_ref[...], patches, preferred_element_type=jnp.float32)  # (Cout, HW)
    acc = acc + b_ref[...]
    o_ref[0] = jnp.maximum(acc, 0.0).astype(o_ref.dtype)


def conv_block_forward(x, params, groups=8, compute_dtype=jnp.float32):
    """Fused GroupNorm -> Conv2d(3x3, pad=1) -> ReLU.

    x: (N, Cin, H, W) NCHW.  Returns (N, Cout, H, W) NCHW (transpose=False path).
    compute_dtype: dtype of the MXU operands (fp32 default; bf16 for v6e/v7x).
    Stats and accumulation are always fp32.
    """
    N, Cin, H, W = x.shape
    w = params["conv_w"]                                     # (Cout, Cin, KH, KW)
    Cout, wcin, KH, KW = w.shape
    assert wcin == Cin and KH == KW and KH % 2 == 1, "square odd kernel expected"
    assert Cin % groups == 0, "GroupNorm requires Cin % groups == 0"
    HW = H * W
    cg = Cin // groups

    x2 = x.reshape(N, Cin, HW)                               # free reshape, no copy
    # block-diagonal group-average matrix: 1/(cg*HW) inside each group, 0 elsewhere
    gid = jnp.arange(Cin, dtype=jnp.int32) // cg
    a_mat = (gid[:, None] == gid[None, :]).astype(jnp.float32) / float(cg * HW)
    gamma = params["gn_gamma"].reshape(Cin, 1).astype(jnp.float32)
    beta = params["gn_beta"].reshape(Cin, 1).astype(jnp.float32)
    # (Cout, Cin, KH, KW) -> (Cout, KH*KW*Cin); row order matches the kernel's taps
    w_mat = jnp.transpose(w, (0, 2, 3, 1)).reshape(Cout, KH * KW * Cin)
    w_mat = w_mat.astype(compute_dtype)
    bias = params["conv_b"].reshape(Cout, 1).astype(jnp.float32)

    kernel = functools.partial(
        _gn_conv_relu_kernel, H=H, W=W, KH=KH, KW=KW,
        compute_dtype=compute_dtype, eps=EPS)

    out = pl.pallas_call(
        kernel,
        out_shape=jax.ShapeDtypeStruct((N, Cout, HW), x.dtype),
        grid=(N,),
        in_specs=[
            pl.BlockSpec((1, Cin, HW), lambda n: (n, 0, 0)),        # activation
            pl.BlockSpec((Cin, Cin), lambda n: (0, 0)),             # group-avg matrix
            pl.BlockSpec((Cin, 1), lambda n: (0, 0)),               # gamma
            pl.BlockSpec((Cin, 1), lambda n: (0, 0)),               # beta
            pl.BlockSpec((Cout, KH * KW * Cin), lambda n: (0, 0)),  # conv weights
            pl.BlockSpec((Cout, 1), lambda n: (0, 0)),              # conv bias
        ],
        out_specs=pl.BlockSpec((1, Cout, HW), lambda n: (n, 0, 0)),
        compiler_params=pltpu.CompilerParams(dimension_semantics=("parallel",)),
    )(x2, a_mat, gamma, beta, w_mat, bias)
    return out.reshape(N, Cout, H, W)


# ----------------------------- pure-JAX reference ----------------------------
def _reference(x, params, groups=8):
    N, C, H, W = x.shape
    xg = x.reshape(N, groups, -1)
    mean = xg.mean(-1, keepdims=True)
    var = ((xg - mean) ** 2).mean(-1, keepdims=True)
    xn = (xg - mean) / jnp.sqrt(var + EPS)
    xn = xn.reshape(N, C, H, W)
    xn = xn * params["gn_gamma"][None, :, None, None] + params["gn_beta"][None, :, None, None]
    y = jax.lax.conv_general_dilated(
        xn, params["conv_w"], window_strides=(1, 1),
        padding=((1, 1), (1, 1)),
        dimension_numbers=("NCHW", "OIHW", "NCHW"))
    y = y + params["conv_b"][None, :, None, None]
    return jnp.maximum(y, 0.0)


if __name__ == "__main__":
    def run_case(N, f1, f2, H, W, groups, compute_dtype, atol, rtol):
        key = jax.random.PRNGKey(0)
        kx, kw, kb, kg, kbeta = jax.random.split(key, 5)
        x = jax.random.normal(kx, (N, f1, H, W), dtype=jnp.float32)
        params = {
            "gn_gamma": 1.0 + 0.1 * jax.random.normal(kg, (f1,), dtype=jnp.float32),
            "gn_beta": 0.1 * jax.random.normal(kbeta, (f1,), dtype=jnp.float32),
            "conv_w": 0.1 * jax.random.normal(kw, (f2, f1, 3, 3), dtype=jnp.float32),
            "conv_b": 0.1 * jax.random.normal(kb, (f2,), dtype=jnp.float32),
        }
        fwd = jax.jit(functools.partial(conv_block_forward, groups=groups,
                                        compute_dtype=compute_dtype))
        out = jax.block_until_ready(fwd(x, params))
        ref = _reference(x, params, groups=groups)
        assert out.shape == (N, f2, H, W), out.shape
        assert jnp.allclose(out, ref, atol=atol, rtol=rtol), (
            str(compute_dtype), float(jnp.max(jnp.abs(out - ref))))

    # module-default-ish config (fp32 MXU operands, tight tolerance)
    run_case(2, 8, 16, 16, 16, 8, jnp.float32, 1e-4, 1e-4)
    # more than one channel per group (cg = 2)
    run_case(2, 16, 32, 16, 16, 8, jnp.float32, 1e-4, 1e-4)
    # bf16 MXU operands / fp32 accumulation (v6e / v7x fast path)
    run_case(2, 8, 16, 16, 16, 8, jnp.bfloat16, 5e-2, 5e-2)

    print("KERNEL_OK")
</pallas_src>

<mosaic_0001>
module attributes {stable_mosaic.version = 11 : i64} {
  func.func @_gn_conv_relu_kernel(%arg0: i32, %arg1: memref<1x8x256xf32, #tpu.memory_space<vmem>>, %arg2: memref<8x8xf32, #tpu.memory_space<vmem>>, %arg3: memref<8x1xf32, #tpu.memory_space<vmem>>, %arg4: memref<8x1xf32, #tpu.memory_space<vmem>>, %arg5: memref<16x72xf32, #tpu.memory_space<vmem>>, %arg6: memref<16x1xf32, #tpu.memory_space<vmem>>, %arg7: memref<1x16x256xf32, #tpu.memory_space<vmem>>) attributes {dimension_semantics = [#tpu.dimension_semantics<parallel>], iteration_bounds = array<i64: 2>, scalar_prefetch = 0 : i64, scratch_operands = 0 : i64, tpu.core_type = #tpu.core_type<tc>, window_params = [{transform_indices = @transform_0, window_bounds = array<i64: 1, 8, 256>}, {pipeline_mode = #tpu.pipeline_mode<synchronous>, transform_indices = @transform_1, window_bounds = array<i64: 8, 8>}, {pipeline_mode = #tpu.pipeline_mode<synchronous>, transform_indices = @transform_2, window_bounds = array<i64: 8, 1>}, {pipeline_mode = #tpu.pipeline_mode<synchronous>, transform_indices = @transform_3, window_bounds = array<i64: 8, 1>}, {pipeline_mode = #tpu.pipeline_mode<synchronous>, transform_indices = @transform_4, window_bounds = array<i64: 16, 72>}, {pipeline_mode = #tpu.pipeline_mode<synchronous>, transform_indices = @transform_5, window_bounds = array<i64: 16, 1>}, {transform_indices = @transform_6, window_bounds = array<i64: 1, 16, 256>}]} {
    %c0 = arith.constant 0 : index
    %c0_0 = arith.constant 0 : index
    %c0_1 = arith.constant 0 : index
    %0 = vector.load %arg1[%c0, %c0_0, %c0_1] : memref<1x8x256xf32, #tpu.memory_space<vmem>>, vector<1x8x256xf32>
    %1 = vector.shape_cast %0 : vector<1x8x256xf32> to vector<8x256xf32>
    %cst = arith.constant dense<0.000000e+00> : vector<8xf32>
    %2 = vector.multi_reduction <add>, %1, %cst [1] : vector<8x256xf32> to vector<8xf32>
    %3 = vector.shape_cast %2 : vector<8xf32> to vector<8x1xf32>
    %4 = arith.mulf %1, %1 : vector<8x256xf32>
    %cst_2 = arith.constant dense<0.000000e+00> : vector<8xf32>
    %5 = vector.multi_reduction <add>, %4, %cst_2 [1] : vector<8x256xf32> to vector<8xf32>
    %6 = vector.shape_cast %5 : vector<8xf32> to vector<8x1xf32>
    %7 = tpu.iota {dimensions = array<i32: 1>} : vector<1x128xi32>
    %c0_i32 = arith.constant 0 : i32
    %8 = vector.broadcast %c0_i32 : i32 to vector<1x128xi32>
    %9 = arith.cmpi eq, %7, %8 : vector<1x128xi32>
    %cst_3 = arith.constant 0.000000e+00 : f32
    %10 = vector.shape_cast %9 : vector<1x128xi1> to vector<1x128xi1>
    %11 = vector.broadcast %10 : vector<1x128xi1> to vector<8x128xi1>
    %12 = vector.shape_cast %3 : vector<8x1xf32> to vector<8x1xf32>
    %13 = vector.broadcast %12 : vector<8x1xf32> to vector<8x128xf32>
    %14 = vector.broadcast %cst_3 : f32 to vector<8x128xf32>
    %15 = arith.select %11, %13, %14 : vector<8x128xi1>, vector<8x128xf32>
    %c1_i32 = arith.constant 1 : i32
    %16 = vector.broadcast %c1_i32 : i32 to vector<1x128xi32>
    %17 = arith.cmpi eq, %7, %16 : vector<1x128xi32>
    %cst_4 = arith.constant 0.000000e+00 : f32
    %18 = vector.shape_cast %17 : vector<1x128xi1> to vector<1x128xi1>
    %19 = vector.broadcast %18 : vector<1x128xi1> to vector<8x128xi1>
    %20 = vector.shape_cast %6 : vector<8x1xf32> to vector<8x1xf32>
    %21 = vector.broadcast %20 : vector<8x1xf32> to vector<8x128xf32>
    %22 = vector.broadcast %cst_4 : f32 to vector<8x128xf32>
    %23 = arith.select %19, %21, %22 : vector<8x128xi1>, vector<8x128xf32>
    %24 = arith.addf %15, %23 : vector<8x128xf32>
    %c0_5 = arith.constant 0 : index
    %c0_6 = arith.constant 0 : index
    %25 = vector.load %arg2[%c0_5, %c0_6] : memref<8x8xf32, #tpu.memory_space<vmem>>, vector<8x8xf32>
    %cst_7 = arith.constant dense<0.000000e+00> : vector<8x128xf32>
    %26 = tpu.matmul %25, %24, %cst_7 {dimension_numbers = #tpu.dot_dimension_numbers<[1], [0], [0], [1], [0, 0, 1, 1], [], []>} : vector<8x8xf32>, vector<8x128xf32>, vector<8x128xf32> -> vector<8x128xf32>
    %27 = vector.extract_strided_slice %26 {offsets = [0, 0], sizes = [8, 1], strides = [1, 1]} : vector<8x128xf32> to vector<8x1xf32>
    %28 = vector.extract_strided_slice %26 {offsets = [0, 1], sizes = [8, 1], strides = [1, 1]} : vector<8x128xf32> to vector<8x1xf32>
    %29 = arith.mulf %27, %27 : vector<8x1xf32>
    %30 = arith.subf %28, %29 : vector<8x1xf32>
    %cst_8 = arith.constant 9.99999974E-6 : f32
    %31 = vector.broadcast %cst_8 : f32 to vector<8x1xf32>
    %32 = arith.addf %30, %31 : vector<8x1xf32>
    %33 = math.rsqrt %32 : vector<8x1xf32>
    %c0_9 = arith.constant 0 : index
    %c0_10 = arith.constant 0 : index
    %34 = vector.load %arg3[%c0_9, %c0_10] : memref<8x1xf32, #tpu.memory_space<vmem>>, vector<8x1xf32>
    %35 = arith.mulf %33, %34 : vector<8x1xf32>
    %c0_11 = arith.constant 0 : index
    %c0_12 = arith.constant 0 : index
    %36 = vector.load %arg4[%c0_11, %c0_12] : memref<8x1xf32, #tpu.memory_space<vmem>>, vector<8x1xf32>
    %37 = arith.mulf %27, %35 : vector<8x1xf32>
    %38 = arith.subf %36, %37 : vector<8x1xf32>
    %39 = vector.broadcast %35 : vector<8x1xf32> to vector<8x256xf32>
    %40 = arith.mulf %1, %39 : vector<8x256xf32>
    %41 = vector.broadcast %38 : vector<8x1xf32> to vector<8x256xf32>
    %42 = arith.addf %40, %41 : vector<8x256xf32>
    %cst_13 = arith.constant 0.000000e+00 : f32
    %43 = vector.broadcast %cst_13 : f32 to vector<8x128xf32>
    %44 = tpu.concatenate %43, %42, %43 in 1 : vector<8x128xf32>, vector<8x256xf32>, vector<8x128xf32> -> vector<8x512xf32>
    %45 = tpu.iota {dimensions = array<i32: 1>} : vector<1x256xi32>
    %c16_i32 = arith.constant 16 : i32
    %c0_i32_14 = arith.constant 0 : i32
    %46 = arith.cmpi eq, %c16_i32, %c0_i32_14 : i32
    %c1_i32_15 = arith.constant 1 : i32
    %47 = arith.select %46, %c1_i32_15, %c16_i32 : i32
    %48 = vector.broadcast %47 : i32 to vector<1x256xi32>
    %49 = arith.remsi %45, %48 : vector<1x256xi32>
    %c0_i32_16 = arith.constant 0 : i32
    %50 = vector.broadcast %c0_i32_16 : i32 to vector<1x256xi32>
    %51 = arith.cmpi ne, %49, %50 : vector<1x256xi32>
    %c0_i32_17 = arith.constant 0 : i32
    %52 = vector.broadcast %c0_i32_17 : i32 to vector<1x256xi32>
    %53 = arith.cmpi slt, %49, %52 : vector<1x256xi32>
    %c0_i32_18 = arith.constant 0 : i32
    %54 = arith.cmpi slt, %47, %c0_i32_18 : i32
    %55 = vector.broadcast %54 : i1 to vector<1x256xi1>
    %56 = vector.broadcast %55 : vector<1x256xi1> to vector<1x256xi1>
    %57 = arith.xori %53, %56 : vector<1x256xi1>
    %58 = arith.andi %57, %51 : vector<1x256xi1>
    %59 = vector.broadcast %47 : i32 to vector<1x256xi32>
    %60 = arith.addi %49, %59 : vector<1x256xi32>
    %61 = arith.select %58, %60, %49 : vector<1x256xi1>, vector<1x256xi32>
    %62 = vector.extract_strided_slice %44 {offsets = [0, 111], sizes = [8, 256], strides = [1, 1]} : vector<8x512xf32> to vector<8x256xf32>
    %c1_i32_19 = arith.constant 1 : i32
    %63 = vector.broadcast %c1_i32_19 : i32 to vector<1x256xi32>
    %64 = arith.cmpi sge, %61, %63 : vector<1x256xi32>
    %cst_20 = arith.constant 0.000000e+00 : f32
    %65 = vector.shape_cast %64 : vector<1x256xi1> to vector<1x256xi1>
    %66 = vector.broadcast %65 : vector<1x256xi1> to vector<8x256xi1>
    %67 = vector.broadcast %cst_20 : f32 to vector<8x256xf32>
    %68 = arith.select %66, %62, %67 : vector<8x256xi1>, vector<8x256xf32>
    %69 = vector.extract_strided_slice %44 {offsets = [0, 112], sizes = [8, 256], strides = [1, 1]} : vector<8x512xf32> to vector<8x256xf32>
    %70 = vector.extract_strided_slice %44 {offsets = [0, 113], sizes = [8, 256], strides = [1, 1]} : vector<8x512xf32> to vector<8x256xf32>
    %c15_i32 = arith.constant 15 : i32
    %71 = vector.broadcast %c15_i32 : i32 to vector<1x256xi32>
    %72 = arith.cmpi slt, %61, %71 : vector<1x256xi32>
    %cst_21 = arith.constant 0.000000e+00 : f32
    %73 = vector.shape_cast %72 : vector<1x256xi1> to vector<1x256xi1>
    %74 = vector.broadcast %73 : vector<1x256xi1> to vector<8x256xi1>
    %75 = vector.broadcast %cst_21 : f32 to vector<8x256xf32>
    %76 = arith.select %74, %70, %75 : vector<8x256xi1>, vector<8x256xf32>
    %77 = vector.extract_strided_slice %44 {offsets = [0, 127], sizes = [8, 256], strides = [1, 1]} : vector<8x512xf32> to vector<8x256xf32>
    %c1_i32_22 = arith.constant 1 : i32
    %78 = vector.broadcast %c1_i32_22 : i32 to vector<1x256xi32>
    %79 = arith.cmpi sge, %61, %78 : vector<1x256xi32>
    %cst_23 = arith.constant 0.000000e+00 : f32
    %80 = vector.shape_cast %79 : vector<1x256xi1> to vector<1x256xi1>
    %81 = vector.broadcast %80 : vector<1x256xi1> to vector<8x256xi1>
    %82 = vector.broadcast %cst_23 : f32 to vector<8x256xf32>
    %83 = arith.select %81, %77, %82 : vector<8x256xi1>, vector<8x256xf32>
    %84 = vector.extract_strided_slice %44 {offsets = [0, 128], sizes = [8, 256], strides = [1, 1]} : vector<8x512xf32> to vector<8x256xf32>
    %85 = vector.extract_strided_slice %44 {offsets = [0, 129], sizes = [8, 256], strides = [1, 1]} : vector<8x512xf32> to vector<8x256xf32>
    %c15_i32_24 = arith.constant 15 : i32
    %86 = vector.broadcast %c15_i32_24 : i32 to vector<1x256xi32>
    %87 = arith.cmpi slt, %61, %86 : vector<1x256xi32>
    %cst_25 = arith.constant 0.000000e+00 : f32
    %88 = vector.shape_cast %87 : vector<1x256xi1> to vector<1x256xi1>
    %89 = vector.broadcast %88 : vector<1x256xi1> to vector<8x256xi1>
    %90 = vector.broadcast %cst_25 : f32 to vector<8x256xf32>
    %91 = arith.select %89, %85, %90 : vector<8x256xi1>, vector<8x256xf32>
    %92 = vector.extract_strided_slice %44 {offsets = [0, 143], sizes = [8, 256], strides = [1, 1]} : vector<8x512xf32> to vector<8x256xf32>
    %c1_i32_26 = arith.constant 1 : i32
    %93 = vector.broadcast %c1_i32_26 : i32 to vector<1x256xi32>
    %94 = arith.cmpi sge, %61, %93 : vector<1x256xi32>
    %cst_27 = arith.constant 0.000000e+00 : f32
    %95 = vector.shape_cast %94 : vector<1x256xi1> to vector<1x256xi1>
    %96 = vector.broadcast %95 : vector<1x256xi1> to vector<8x256xi1>
    %97 = vector.broadcast %cst_27 : f32 to vector<8x256xf32>
    %98 = arith.select %96, %92, %97 : vector<8x256xi1>, vector<8x256xf32>
    %99 = vector.extract_strided_slice %44 {offsets = [0, 144], sizes = [8, 256], strides = [1, 1]} : vector<8x512xf32> to vector<8x256xf32>
    %100 = vector.extract_strided_slice %44 {offsets = [0, 145], sizes = [8, 256], strides = [1, 1]} : vector<8x512xf32> to vector<8x256xf32>
    %c15_i32_28 = arith.constant 15 : i32
    %101 = vector.broadcast %c15_i32_28 : i32 to vector<1x256xi32>
    %102 = arith.cmpi slt, %61, %101 : vector<1x256xi32>
    %cst_29 = arith.constant 0.000000e+00 : f32
    %103 = vector.shape_cast %102 : vector<1x256xi1> to vector<1x256xi1>
    %104 = vector.broadcast %103 : vector<1x256xi1> to vector<8x256xi1>
    %105 = vector.broadcast %cst_29 : f32 to vector<8x256xf32>
    %106 = arith.select %104, %100, %105 : vector<8x256xi1>, vector<8x256xf32>
    %107 = tpu.concatenate %68, %69, %76, %83, %84, %91, %98, %99, %106 in 0 : vector<8x256xf32>, vector<8x256xf32>, vector<8x256xf32>, vector<8x256xf32>, vector<8x256xf32>, vector<8x256xf32>, vector<8x256xf32>, vector<8x256xf32>, vector<8x256xf32> -> vector<72x256xf32>
    %c0_30 = arith.constant 0 : index
    %c0_31 = arith.constant 0 : index
    %108 = vector.load %arg5[%c0_30, %c0_31] : memref<16x72xf32, #tpu.memory_space<vmem>>, vector<16x72xf32>
    %cst_32 = arith.constant dense<0.000000e+00> : vector<16x256xf32>
    %109 = tpu.matmul %108, %107, %cst_32 {dimension_numbers = #tpu.dot_dimension_numbers<[1], [0], [0], [1], [0, 0, 1, 1], [], []>} : vector<16x72xf32>, vector<72x256xf32>, vector<16x256xf32> -> vector<16x256xf32>
    %c0_33 = arith.constant 0 : index
    %c0_34 = arith.constant 0 : index
    %110 = vector.load %arg6[%c0_33, %c0_34] : memref<16x1xf32, #tpu.memory_space<vmem>>, vector<16x1xf32>
    %111 = vector.broadcast %110 : vector<16x1xf32> to vector<16x256xf32>
    %112 = arith.addf %109, %111 : vector<16x256xf32>
    %cst_35 = arith.constant 0.000000e+00 : f32
    %113 = vector.broadcast %cst_35 : f32 to vector<16x256xf32>
    %114 = arith.maximumf %112, %113 : vector<16x256xf32>
    %c0_36 = arith.constant 0 : index
    %c0_37 = arith.constant 0 : index
    %c0_38 = arith.constant 0 : index
    %115 = vector.load %arg7[%c0_36, %c0_37, %c0_38] : memref<1x16x256xf32, #tpu.memory_space<vmem>>, vector<1x16x256xf32>
    %116 = vector.shape_cast %115 : vector<1x16x256xf32> to vector<16x256xf32>
    %117 = vector.shape_cast %114 : vector<16x256xf32> to vector<1x16x256xf32>
    tpu.vector_store %arg7[%c0_36, %c0_37, %c0_38], %117 {strides = array<i32>} : memref<1x16x256xf32, #tpu.memory_space<vmem>>, vector<1x16x256xf32>,
    return
  }
  func.func @transform_0(%arg0: i32) -> (i32, i32, i32) {
    %c0_i32 = arith.constant 0 : i32
    %c0_i32_0 = arith.constant 0 : i32
    %c0_i32_1 = arith.constant 0 : i32
    return %arg0, %c0_i32, %c0_i32_0 : i32, i32, i32
  }
  func.func @transform_1(%arg0: i32) -> (i32, i32) {
    %c0_i32 = arith.constant 0 : i32
    %c0_i32_0 = arith.constant 0 : i32
    %c0_i32_1 = arith.constant 0 : i32
    return %c0_i32, %c0_i32_0 : i32, i32
  }
  func.func @transform_2(%arg0: i32) -> (i32, i32) {
    %c0_i32 = arith.constant 0 : i32
    %c0_i32_0 = arith.constant 0 : i32
    %c0_i32_1 = arith.constant 0 : i32
    return %c0_i32, %c0_i32_0 : i32, i32
  }
  func.func @transform_3(%arg0: i32) -> (i32, i32) {
    %c0_i32 = arith.constant 0 : i32
    %c0_i32_0 = arith.constant 0 : i32
    %c0_i32_1 = arith.constant 0 : i32
    return %c0_i32, %c0_i32_0 : i32, i32
  }
  func.func @transform_4(%arg0: i32) -> (i32, i32) {
    %c0_i32 = arith.constant 0 : i32
    %c0_i32_0 = arith.constant 0 : i32
    %c0_i32_1 = arith.constant 0 : i32
    return %c0_i32, %c0_i32_0 : i32, i32
  }
  func.func @transform_5(%arg0: i32) -> (i32, i32) {
    %c0_i32 = arith.constant 0 : i32
    %c0_i32_0 = arith.constant 0 : i32
    %c0_i32_1 = arith.constant 0 : i32
    return %c0_i32, %c0_i32_0 : i32, i32
  }
  func.func @transform_6(%arg0: i32) -> (i32, i32, i32) {
    %c0_i32 = arith.constant 0 : i32
    %c0_i32_0 = arith.constant 0 : i32
    %c0_i32_1 = arith.constant 0 : i32
    return %arg0, %c0_i32, %c0_i32_0 : i32, i32, i32
  }
}

</mosaic_0001>

<llo_original>
// kernel: conv_block_forward.1
$region0: #{conv_block_forward.1}
  #allocation0 [shape = 'u32[]', space=smem, size = 0x4, offset = 0x4, fixed_abs, tag = 'smem constant byte address 0x4 - core index']
  #allocation1 [shape = 'u32[144,128]{1,0:T(1,128)}', space=vmem, size = 0x12000, scoped, tag = 'internal scratch']
  %s0 = inlined_call_operand.vmem [shape: f32[2,8,256], index: 0, kind: input, shape index: {}]
  %s1 = inlined_call_operand.vmem [shape: f32[8,8], index: 1, kind: input, shape index: {}]
  %s2 = inlined_call_operand.vmem [shape: f32[8,1], index: 2, kind: input, shape index: {}]
  %s3 = inlined_call_operand.vmem [shape: f32[8,1], index: 3, kind: input, shape index: {}]
  %s4 = inlined_call_operand.vmem [shape: f32[16,72], index: 4, kind: input, shape index: {}]
  %s5 = inlined_call_operand.vmem [shape: f32[16,1], index: 5, kind: input, shape index: {}]
  %s6 = inlined_call_operand.vmem [shape: f32[2,16,256], index: 6, kind: output, shape index: {}]
  %s7 = sld [smem:[#allocation0]]
  $region57: #{conv_block_forward.1} parent=0
    _
  %s9 = ssub.s32 1, %s7
  %s10 = scalar_select 0, %s9, %s7
  loop: start=0, step=1, limit=4
  $region2: #{conv_block_forward.1} parent=0 // loop_pre_header
    _
  $region3: #{conv_block_forward.1} parent=0 // loop_header
    %s12 = sphi 0, %s16
    %p13 = scmp.ge.s32.totalorder %s12, 4
    %s22 = sphi 0, %s24
    %s25 = sphi 0, %s22
    %s26 = sphi 0, %s25
    %s42 = sphi 0, %s26
    %s46 = sphi 0, %s46
    %s48 = sphi 0, %s46
    %s49 = sphi 0, %s48
    %s63 = sphi 0, %s49
    %s67 = sphi 0, %s67
    %s69 = sphi 0, %s67
    %s70 = sphi 0, %s69
    %s84 = sphi 0, %s70
    %s88 = sphi 0, %s88
    %s90 = sphi 0, %s88
    %s91 = sphi 0, %s90
    %s105 = sphi 0, %s91
    %s109 = sphi 0, %s109
    %s111 = sphi 0, %s109
    %s112 = sphi 0, %s111
    %s126 = sphi 0, %s112
    %s130 = sphi 0, %s130
    %s132 = sphi 0, %s130
    %s133 = sphi 0, %s132
    %s147 = sphi 0, %s133
    %s153 = sphi 0, %s155
    %s156 = sphi 0, %s153
    %s157 = sphi 0, %s156
    %s173 = sphi 0, %s157
  $region4: #{conv_block_forward.1} parent=0 // loop_header_branch
    %15 = sbr.rel (%p13) target = $region8
  $region5: #{conv_block_forward.1} parent=0 // loop_body
    %s17 = ssub.s32 %s12, 1
    %s18 = ssub.s32 %s12, 2
    %s19 = sadd.s32 %s12, 1
    %s20 = ssub.s32 %s12, %s19
    %p21 = scmp.eq.s32.totalorder %s20, 0
    %s23 = sadd.s32 %s22, 1
    %s24 = scalar_select %p21, %s22, %s23
    %p27 = pneg %p21
    %p28 = scmp.eq.s32.totalorder %s12, 1
    %p29 = por %p27, %p28
    %p30 = scmp.ne.s32.totalorder %s22, %s25
    %p31 = scmp.eq.s32.totalorder %s12, 0
    %p32 = por %p30, %p31
    %p33 = scmp.ne.s32.totalorder %s22, %s25
    %p34 = scmp.eq.s32.totalorder %s17, 1
    %p35 = por %p33, %p34
    %p36 = scmp.ne.s32.totalorder %s25, %s26
    %p37 = scmp.eq.s32.totalorder %s17, 0
    %p38 = por %p36, %p37
    %p39 = scmp.ne.s32.totalorder %s25, %s26
    %p40 = scmp.eq.s32.totalorder %s18, 1
    %p41 = por %p39, %p40
    %p43 = scmp.ne.s32.totalorder %s26, %s42
    %p44 = scmp.eq.s32.totalorder %s18, 0
    %p45 = por %p43, %p44
    %s47 = sadd.s32 %s46, 1
    %p50 = scmp.eq.s32.totalorder %s12, 1
    %p51 = scmp.ne.s32.totalorder %s46, %s48
    %p52 = scmp.eq.s32.totalorder %s12, 0
    %p53 = por %p51, %p52
    %p54 = scmp.ne.s32.totalorder %s46, %s48
    %p55 = scmp.eq.s32.totalorder %s17, 1
    %p56 = por %p54, %p55
    %p57 = scmp.ne.s32.totalorder %s48, %s49
    %p58 = scmp.eq.s32.totalorder %s17, 0
    %p59 = por %p57, %p58
    %p60 = scmp.ne.s32.totalorder %s48, %s49
    %p61 = scmp.eq.s32.totalorder %s18, 1
    %p62 = por %p60, %p61
    %p64 = scmp.ne.s32.totalorder %s49, %s63
    %p65 = scmp.eq.s32.totalorder %s18, 0
    %p66 = por %p64, %p65
    %s68 = sadd.s32 %s67, 1
    %p71 = scmp.eq.s32.totalorder %s12, 1
    %p72 = scmp.ne.s32.totalorder %s67, %s69
    %p73 = scmp.eq.s32.totalorder %s12, 0
    %p74 = por %p72, %p73
    %p75 = scmp.ne.s32.totalorder %s67, %s69
    %p76 = scmp.eq.s32.totalorder %s17, 1
    %p77 = por %p75, %p76
    %p78 = scmp.ne.s32.totalorder %s69, %s70
    %p79 = scmp.eq.s32.totalorder %s17, 0
    %p80 = por %p78, %p79
    %p81 = scmp.ne.s32.totalorder %s69, %s70
    %p82 = scmp.eq.s32.totalorder %s18, 1
    %p83 = por %p81, %p82
    %p85 = scmp.ne.s32.totalorder %s70, %s84
    %p86 = scmp.eq.s32.totalorder %s18, 0
    %p87 = por %p85, %p86
    %s89 = sadd.s32 %s88, 1
    %p92 = scmp.eq.s32.totalorder %s12, 1
    %p93 = scmp.ne.s32.totalorder %s88, %s90
    %p94 = scmp.eq.s32.totalorder %s12, 0
    %p95 = por %p93, %p94
    %p96 = scmp.ne.s32.totalorder %s88, %s90
    %p97 = scmp.eq.s32.totalorder %s17, 1
    %p98 = por %p96, %p97
    %p99 = scmp.ne.s32.totalorder %s90, %s91
    %p100 = scmp.eq.s32.totalorder %s17, 0
    %p101 = por %p99, %p100
    %p102 = scmp.ne.s32.totalorder %s90, %s91
    %p103 = scmp.eq.s32.totalorder %s18, 1
    %p104 = por %p102, %p103
    %p106 = scmp.ne.s32.totalorder %s91, %s105
    %p107 = scmp.eq.s32.totalorder %s18, 0
    %p108 = por %p106, %p107
    %s110 = sadd.s32 %s109, 1
    %p113 = scmp.eq.s32.totalorder %s12, 1
    %p114 = scmp.ne.s32.totalorder %s109, %s111
    %p115 = scmp.eq.s32.totalorder %s12, 0
    %p116 = por %p114, %p115
    %p117 = scmp.ne.s32.totalorder %s109, %s111
    %p118 = scmp.eq.s32.totalorder %s17, 1
    %p119 = por %p117, %p118
    %p120 = scmp.ne.s32.totalorder %s111, %s112
    %p121 = scmp.eq.s32.totalorder %s17, 0
    %p122 = por %p120, %p121
    %p123 = scmp.ne.s32.totalorder %s111, %s112
    %p124 = scmp.eq.s32.totalorder %s18, 1
    %p125 = por %p123, %p124
    %p127 = scmp.ne.s32.totalorder %s112, %s126
    %p128 = scmp.eq.s32.totalorder %s18, 0
    %p129 = por %p127, %p128
    %s131 = sadd.s32 %s130, 1
    %p134 = scmp.eq.s32.totalorder %s12, 1
    %p135 = scmp.ne.s32.totalorder %s130, %s132
    %p136 = scmp.eq.s32.totalorder %s12, 0
    %p137 = por %p135, %p136
    %p138 = scmp.ne.s32.totalorder %s130, %s132
    %p139 = scmp.eq.s32.totalorder %s17, 1
    %p140 = por %p138, %p139
    %p141 = scmp.ne.s32.totalorder %s132, %s133
    %p142 = scmp.eq.s32.totalorder %s17, 0
    %p143 = por %p141, %p142
    %p144 = scmp.ne.s32.totalorder %s132, %s133
    %p145 = scmp.eq.s32.totalorder %s18, 1
    %p146 = por %p144, %p145
    %p148 = scmp.ne.s32.totalorder %s133, %s147
    %p149 = scmp.eq.s32.totalorder %s18, 0
    %p150 = por %p148, %p149
    %s151 = ssub.s32 %s12, %s19
    %p152 = scmp.eq.s32.totalorder %s151, 0
    %s154 = sadd.s32 %s153, 1
    %s155 = scalar_select %p152, %s153, %s154
    %p158 = pneg %p152
    %p159 = scmp.eq.s32.totalorder %s12, 1
    %p160 = por %p158, %p159
    %p161 = scmp.ne.s32.totalorder %s153, %s156
    %p162 = scmp.eq.s32.totalorder %s12, 0
    %p163 = por %p161, %p162
    %p164 = scmp.ne.s32.totalorder %s153, %s156
    %p165 = scmp.eq.s32.totalorder %s17, 1
    %p166 = por %p164, %p165
    %p167 = scmp.ne.s32.totalorder %s156, %s157
    %p168 = scmp.eq.s32.totalorder %s17, 0
    %p169 = por %p167, %p168
    %p170 = scmp.ne.s32.totalorder %s156, %s157
    %p171 = scmp.eq.s32.totalorder %s18, 1
    %p172 = por %p170, %p171
    %p174 = scmp.ne.s32.totalorder %s157, %s173
    %p175 = scmp.eq.s32.totalorder %s18, 0
    %p176 = por %p174, %p175
    %p177 = scmp.le.s32.totalorder 1, %s12
    %p178 = scmp.lt.s32.totalorder %s12, 3
    %p179 = pnand %p177, %p178
    %p180 = pneg %p179
    // Predicated region
    $region9: #{conv_block_forward.1} parent=5 // pred_check
      _
    $region10: #{conv_block_forward.1} parent=5 // pred_check_branch
      %182 = sbr.rel (%p179) target = $region12
    $region11: #{conv_block_forward.1} parent=5 // pred_region
      %s183 = ssub.s32 %s12, 1
      // Predicated region
      $region13: #{conv_block_forward.1} parent=11 // pred_check
        %p184 = pneg %p59
      $region14: #{conv_block_forward.1} parent=11 // pred_check_branch
        %186 = sbr.rel (%p184) target = $region16
      $region15: #{conv_block_forward.1} parent=11 // pred_region
        _
      $region16: #{conv_block_forward.1} parent=11 // pred_fallthru
        _
      // Predicated region
      $region17: #{conv_block_forward.1} parent=11 // pred_check
        %p187 = pneg %p80
      $region18: #{conv_block_forward.1} parent=11 // pred_check_branch
        %189 = sbr.rel (%p187) target = $region20
      $region19: #{conv_block_forward.1} parent=11 // pred_region
        _
      $region20: #{conv_block_forward.1} parent=11 // pred_fallthru
        _
      // Predicated region
      $region21: #{conv_block_forward.1} parent=11 // pred_check
        %p190 = pneg %p101
      $region22: #{conv_block_forward.1} parent=11 // pred_check_branch
        %192 = sbr.rel (%p190) target = $region24
      $region23: #{conv_block_forward.1} parent=11 // pred_region
        _
      $region24: #{conv_block_forward.1} parent=11 // pred_fallthru
        _
      // Predicated region
      $region25: #{conv_block_forward.1} parent=11 // pred_check
        %p193 = pneg %p122
      $region26: #{conv_block_forward.1} parent=11 // pred_check_branch
        %195 = sbr.rel (%p193) target = $region28
      $region27: #{conv_block_forward.1} parent=11 // pred_region
        _
      $region28: #{conv_block_forward.1} parent=11 // pred_fallthru
        _
      // Predicated region
      $region29: #{conv_block_forward.1} parent=11 // pred_check
        %p196 = pneg %p143
      $region30: #{conv_block_forward.1} parent=11 // pred_check_branch
        %198 = sbr.rel (%p196) target = $region32
      $region31: #{conv_block_forward.1} parent=11 // pred_region
        _
      $region32: #{conv_block_forward.1} parent=11 // pred_fallthru
        _
    $region12: #{conv_block_forward.1} parent=5 // pred_fallthru
      _
    %p199 = scmp.lt.s32.totalorder %s12, 2
    // Predicated region
    $region33: #{conv_block_forward.1} parent=5 // pred_check
      %p200 = pneg %p199
    $region34: #{conv_block_forward.1} parent=5 // pred_check_branch
      %202 = sbr.rel (%p200) target = $region36
    $region35: #{conv_block_forward.1} parent=5 // pred_region
      // Predicated region
      $region37: #{conv_block_forward.1} parent=35 // pred_check
        %p203 = pneg %p32
      $region38: #{conv_block_forward.1} parent=35 // pred_check_branch
        %205 = sbr.rel (%p203) target = $region40
      $region39: #{conv_block_forward.1} parent=35 // pred_region
        %p206 = scmp.lt.s32.totalorder %s12, 1
        %s207 = scalar_select %p206, %s12, 1
        %s208 = smul.addr %s207, 2
        %s209 = smul.addr %s208, 8
        %s210 = scalar_lea.vmem %s0, %s209
      $region40: #{conv_block_forward.1} parent=35 // pred_fallthru
        _
    $region36: #{conv_block_forward.1} parent=5 // pred_fallthru
      _
    %p211 = scmp.le.s32.totalorder 1, %s12
    %p212 = scmp.lt.s32.totalorder %s12, 3
    %p213 = pnand %p211, %p212
    %p214 = pneg %p213
    // Predicated region
    $region41: #{conv_block_forward.1} parent=5 // pred_check
      _
    $region42: #{conv_block_forward.1} parent=5 // pred_check_branch
      %216 = sbr.rel (%p213) target = $region44
    $region43: #{conv_block_forward.1} parent=5 // pred_region
      %s217 = ssub.s32 %s12, 1
      %p218 = scmp.lt.s32.totalorder %s17, 1
      %s219 = scalar_select %p218, %s17, 1
      %s220 = smul.addr %s219, 2
      %s221 = smul.addr %s220, 8
      %s222 = scalar_lea.vmem %s0, %s221
      %p223 = pneg %p38
      %p224 = pneg %p35
      %p225 = pneg %p59
      %p226 = pneg %p56
      %p227 = pneg %p80
      %p228 = pneg %p77
      %p229 = pneg %p101
      %p230 = pneg %p98
      %p231 = pneg %p122
      %p232 = pneg %p119
      %p233 = pneg %p143
      %p234 = pneg %p140
      %p235 = pneg %p169
      %p236 = pneg %p166
      %p237 = scmp.lt.s32.totalorder %s17, 1
      %s238 = scalar_select %p237, %s17, 1
      %s239 = smul.addr %s238, 4
      %s240 = smul.addr %s239, 8
      %s241 = scalar_lea.vmem %s6, %s240
      %p242 = scmp.lt.s32.totalorder %s17, 1
      %s243 = scalar_select %p242, %s17, 1
      %s244 = smul.addr %s243, 2
      %s245 = smul.addr %s244, 8
      %s246 = scalar_lea.vmem %s0, %s245
      %p247 = scmp.lt.s32.totalorder %s17, 1
      %s248 = scalar_select %p247, %s17, 1
      %s249 = smul.addr %s248, 4
      %s250 = smul.addr %s249, 8
      %s251 = scalar_lea.vmem %s6, %s250
      %v252 = vld [vmem:[%s246] sm:$0xff]
      %v253 = vld [vmem:[%s246 + $0x8] sm:$0xff]
      %v254 = vadd.f32 %v252, %v253
      %255 = vadd.xlane.f32.xlu0 %v254
      %v256 = vpop.xlane.xlu0 %255
      %v257 = vmul.f32 %v252, %v252
      %v258 = vmul.f32 %v253, %v253
      %v259 = vadd.f32 %v257, %v258
      %260 = vadd.xlane.f32.xlu0 %v259
      %v261 = vpop.xlane.xlu0 %260
      %v262 = vlaneseq
      %v263 = vand.u32 %v262, 127
      %vm264 = vcmp.eq.s32.totalorder %v263, 0
      %v265 = vsel %vm264, 1, 0
      %vm266 = vcmp.eq.s32.totalorder %v265, 1
      %v267 = vsel %vm266, %v256, 0.0
      %vm268 = vcmp.eq.s32.totalorder %v263, 1
      %v269 = vsel %vm268, 1, 0
      %vm270 = vcmp.eq.s32.totalorder %v269, 1
      %v271 = vsel %vm270, %v261, 0.0
      %v272 = vadd.f32 %v267, %v271
      %v273 = vld [vmem:[%s1] sm:$0xff]
      %vm274 = vcmask 64512
      %v276 = vsel %vm274, %v273, 0
      %278 = vmatprep.subr.mxu0 0.0
      %279 = vmatpush1.msra.mxu0 %v272
      %280 = vmatprep.subr.mxu0 0.0
      %281 = vmatpush1.msra.mxu0 0.0
      %282 = vmatprep.subr.mxu0 0.0
      %283 = vmatpush1.msra.mxu0 0.0
      %284 = vmatprep.subr.mxu0 0.0
      %285 = vmatpush1.msra.mxu0 0.0
      %286 = vmatprep.subr.mxu0 0.0
      %287 = vmatpush1.msra.mxu0 0.0
      %288 = vmatprep.subr.mxu0 0.0
      %289 = vmatpush1.msra.mxu0 0.0
      %290 = vmatprep.subr.mxu0 0.0
      %291 = vmatpush1.msra.mxu0 0.0
      %292 = vmatprep.subr.mxu0 0.0
      %293 = vmatpush1.msra.mxu0 0.0
      %294 = vmatprep.subr.mxu0 0.0
      %295 = vmatpush1.msra.mxu0 0.0
      %296 = vmatprep.subr.mxu0 0.0
      %297 = vmatpush1.msra.mxu0 0.0
      %298 = vmatprep.subr.mxu0 0.0
      %299 = vmatpush1.msra.mxu0 0.0
      %300 = vmatprep.subr.mxu0 0.0
      %301 = vmatpush1.msra.mxu0 0.0
      %302 = vmatprep.subr.mxu0 0.0
      %303 = vmatpush1.msra.mxu0 0.0
      %304 = vmatprep.subr.mxu0 0.0
      %305 = vmatpush1.msra.mxu0 0.0
      %306 = vmatprep.subr.mxu0 0.0
      %307 = vmatpush1.msra.mxu0 0.0
      %308 = vmatprep.subr.mxu0 0.0
      %309 = vmatpush1.msra.mxu0 0.0
      %310 = vmatprep.subr.mxu0 0.0
      %311 = vmatpush1.msra.mxu0 0.0
      %312 = vmatprep.subr.mxu0 0.0
      %313 = vmatpush1.msra.mxu0 0.0
      %314 = vmatprep.subr.mxu0 0.0
      %315 = vmatpush1.msra.mxu0 0.0
      %316 = vmatprep.subr.mxu0 0.0
      %317 = vmatpush1.msra.mxu0 0.0
      %318 = vmatprep.subr.mxu0 0.0
      %319 = vmatpush1.msra.mxu0 0.0
      %320 = vmatprep.subr.mxu0 0.0
      %321 = vmatpush1.msra.mxu0 0.0
      %322 = vmatprep.subr.mxu0 0.0
      %323 = vmatpush1.msra.mxu0 0.0
      %324 = vmatprep.subr.mxu0 0.0
      %325 = vmatpush1.msra.mxu0 0.0
      %326 = vmatprep.subr.mxu0 0.0
      %327 = vmatpush1.msra.mxu0 0.0
      %328 = vmatprep.subr.mxu0 0.0
      %329 = vmatpush1.msra.mxu0 0.0
      %330 = vmatprep.subr.mxu0 0.0
      %331 = vmatpush1.msra.mxu0 0.0
      %332 = vmatprep.subr.mxu0 0.0
      %333 = vmatpush1.msra.mxu0 0.0
      %334 = vmatprep.subr.mxu0 0.0
      %335 = vmatpush1.msra.mxu0 0.0
      %336 = vmatprep.subr.mxu0 0.0
      %337 = vmatpush1.msra.mxu0 0.0
      %338 = vmatprep.subr.mxu0 0.0
      %339 = vmatpush1.msra.mxu0 0.0
      %340 = vmatprep.subr.mxu0 0.0
      %341 = vmatpush1.msra.mxu0 0.0
      %342 = vmatprep.mubr.f32.mxu0 0.0
      %343 = vmatmul.mubr.f32.gmra.mrb[0].mxu0 %v276
      %v344 = vpop.f32.mrb[0].mxu0
      %v345 = vadd.f32 0.0, %v344
      %v346 = vpop.f32.mrb[0].mxu0
      %347 = vdwg.mxu0
      %v348 = vmul.f32 %v345, %v345
      %350 = vrot.lane.b32.xlu0 %v348, 1
      %v351 = vpop.permute.xlu0 %350
      %v353 = vsub.f32 %v345, %v351
      %v354 = vadd.f32 %v353, 1e-05
      %v355 = vrsqrt.pop %v354
      %v356 = vld [vmem:[%s2] sm:$0xff]
      %358 = vrot.lane.b32.xlu0 %v356, 1
      %v359 = vpop.permute.xlu0 %358
      %v361 = vmul.f32 %v355, %v359
      %v362 = vld [vmem:[%s3] sm:$0xff]
      %364 = vrot.lane.b32.xlu0 %v361, 127
      %v365 = vpop.permute.xlu0 %364
      %v367 = vmul.f32 %v345, %v365
      %v368 = vsub.f32 %v362, %v367
      %369 = vset.pattern.permute.xlu0 1
      %370 = vperm.xlu0 %369, %v361
      %v371 = vpop.permute.xlu0 %370
      %v373 = vmul.f32 %v252, %v371
      %v374 = vmul.f32 %v253, %v371
      %376 = vset.pattern.permute.xlu0 0
      %377 = vperm.xlu0 %376, %v368
      %v378 = vpop.permute.xlu0 %377
      %v380 = vadd.f32 %v373, %v378
      %v381 = vadd.f32 %v374, %v378
      %v382 = vadd.s32 %v263, 128
      %vm383 = vcmp.lt.s32.totalorder %v263, 0
      %v384 = vsub.s32 0, %v263
      %v385 = vsel %vm383, %v384, %v263
      %v386 = vshrl.u32 %v385, 4
      %v387 = vand.u32 %v385, 15
      %v388 = vsub.s32 0, %v387
      %v389 = vsel %vm383, %v388, %v387
      %vm390 = vcmp.lt.s32.totalorder %v382, 0
      %v391 = vsub.s32 0, %v382
      %v392 = vsel %vm390, %v391, %v382
      %v393 = vshrl.u32 %v392, 4
      %v394 = vand.u32 %v392, 15
      %v395 = vsub.s32 0, %v394
      %v396 = vsel %vm390, %v395, %v394
      %vm397 = vcmp.ne.s32.totalorder %v389, 0
      %vm398 = vcmp.ne.s32.totalorder %v396, 0
      %vm399 = vcmp.lt.s32.totalorder %v389, 0
      %vm400 = vcmp.lt.s32.totalorder %v396, 0
      %vm401 = vmand %vm399, %vm397
      %vm402 = vmand %vm400, %vm398
      %v403 = vadd.s32 %v389, 16
      %v404 = vadd.s32 %v396, 16
      %v405 = vsel %vm401, %v403, %v389
      %v406 = vsel %vm402, %v404, %v396
      %vm407 = vcmp.ge.s32.totalorder %v405, 1
      %vm408 = vcmp.ge.s32.totalorder %v406, 1
      %v409 = vsel %vm407, 1, 0
      %v410 = vsel %vm408, 1, 0
      %vm411 = vcmp.eq.s32.totalorder %v409, 1
      %vm412 = vcmp.eq.s32.totalorder %v410, 1
      %416 = vrot.lane.b32.xlu0 0.0, 17
      %v417 = vpop.permute.xlu0 %416
      %418 = vrot.lane.b32.xlu0 %v380, 17
      %v419 = vpop.permute.xlu0 %418
      %420 = vrot.lane.b32.xlu0 %v381, 17
      %v421 = vpop.permute.xlu0 %420
      %vm422 = vcmask 138240
      %v423 = vsel %vm422, %v417, %v419
      %v424 = vsel %vm422, %v419, %v421
      %v427 = vsel %vm411, %v423, 0.0
      %v428 = vsel %vm412, %v424, 0.0
      %vm429 = vcmp.lt.s32.totalorder %v405, 15
      %vm430 = vcmp.lt.s32.totalorder %v406, 15
      %v431 = vsel %vm429, 1, 0
      %v432 = vsel %vm430, 1, 0
      %vm433 = vcmp.eq.s32.totalorder %v431, 1
      %vm434 = vcmp.eq.s32.totalorder %v432, 1
      %435 = vrot.lane.b32.xlu0 0.0, 15
      %v436 = vpop.permute.xlu0 %435
      %437 = vrot.lane.b32.xlu0 %v380, 15
      %v438 = vpop.permute.xlu0 %437
      %439 = vrot.lane.b32.xlu0 %v381, 15
      %v440 = vpop.permute.xlu0 %439
      %vm441 = vcmask 121856
      %v442 = vsel %vm441, %v436, %v438
      %v443 = vsel %vm441, %v438, %v440
      %v446 = vsel %vm433, %v442, 0.0
      %v447 = vsel %vm434, %v443, 0.0
      %448 = vrot.lane.b32.xlu0 0.0, 1
      %v449 = vpop.permute.xlu0 %448
      %450 = vrot.lane.b32.xlu0 %v380, 1
      %v451 = vpop.permute.xlu0 %450
      %452 = vrot.lane.b32.xlu0 %v381, 1
      %v453 = vpop.permute.xlu0 %452
      %vm454 = vcmask 7168
      %v455 = vsel %vm454, %v449, %v451
      %v456 = vsel %vm454, %v451, %v453
      %v459 = vsel %vm411, %v455, 0.0
      %v460 = vsel %vm412, %v456, 0.0
      %461 = vrot.lane.b32.xlu0 %v380, 127
      %v462 = vpop.permute.xlu0 %461
      %463 = vrot.lane.b32.xlu0 %v381, 127
      %v464 = vpop.permute.xlu0 %463
      %465 = vrot.lane.b32.xlu0 0.0, 127
      %v466 = vpop.permute.xlu0 %465
      %vm467 = vcmask 1039360
      %v468 = vsel %vm467, %v462, %v464
      %v469 = vsel %vm467, %v464, %v466
      %v472 = vsel %vm433, %v468, 0.0
      %v473 = vsel %vm434, %v469, 0.0
      %474 = vrot.lane.b32.xlu0 %v380, 113
      %v475 = vpop.permute.xlu0 %474
      %476 = vrot.lane.b32.xlu0 %v381, 113
      %v477 = vpop.permute.xlu0 %476
      %478 = vrot.lane.b32.xlu0 0.0, 113
      %v479 = vpop.permute.xlu0 %478
      %vm480 = vcmask 924672
      %v481 = vsel %vm480, %v475, %v477
      %v482 = vsel %vm480, %v477, %v479
      %v485 = vsel %vm411, %v481, 0.0
      %v486 = vsel %vm412, %v482, 0.0
      %487 = vrot.lane.b32.xlu0 %v380, 111
      %v488 = vpop.permute.xlu0 %487
      %489 = vrot.lane.b32.xlu0 %v381, 111
      %v490 = vpop.permute.xlu0 %489
      %491 = vrot.lane.b32.xlu0 0.0, 111
      %v492 = vpop.permute.xlu0 %491
      %vm493 = vcmask 908288
      %v494 = vsel %vm493, %v488, %v490
      %v495 = vsel %vm493, %v490, %v492
      %v498 = vsel %vm433, %v494, 0.0
      %v499 = vsel %vm434, %v495, 0.0
      %500 = vrot.lane.b32.xlu0 0.0, 16
      %v501 = vpop.permute.xlu0 %500
      %502 = vrot.lane.b32.xlu0 %v380, 16
      %v503 = vpop.permute.xlu0 %502
      %504 = vrot.lane.b32.xlu0 %v381, 16
      %v505 = vpop.permute.xlu0 %504
      %vm506 = vcmask 130048
      %v507 = vsel %vm506, %v501, %v503
      %v508 = vsel %vm506, %v503, %v505
      %511 = vrot.lane.b32.xlu0 %v380, 112
      %v512 = vpop.permute.xlu0 %511
      %513 = vrot.lane.b32.xlu0 %v381, 112
      %v514 = vpop.permute.xlu0 %513
      %515 = vrot.lane.b32.xlu0 0.0, 112
      %v516 = vpop.permute.xlu0 %515
      %vm517 = vcmask 916480
      %v518 = vsel %vm517, %v512, %v514
      %v519 = vsel %vm517, %v514, %v516
      %v522 = vld [vmem:[%s4] sm:$0xff]
      %v523 = vld [vmem:[%s4 + $0x8] sm:$0xff]
      %v524 = vld [vmem:[%s5] sm:$0xff]
      %v525 = vld [vmem:[%s5 + $0x8] sm:$0xff]
      %527 = vset.pattern.permute.xlu0 0
      %528 = vperm.xlu0 %527, %v524
      %v529 = vpop.permute.xlu0 %528
      %532 = vset.pattern.permute.xlu0 0
      %533 = vperm.xlu0 %532, %v525
      %v534 = vpop.permute.xlu0 %533
      %vm536 = vcmask 588800
      %v538 = vsel %vm536, %v522, 0
      %v541 = vsel %vm536, %v523, 0
      %543 = vmatprep.subr.mxu0 %v428
      %544 = vmatpush1.msra.mxu0 %v427
      %545 = vmatprep.subr.mxu0 %v508
      %546 = vmatpush1.msra.mxu0 %v507
      %547 = vmatprep.subr.mxu0 %v447
      %548 = vmatpush1.msra.mxu0 %v446
      %549 = vmatprep.subr.mxu0 %v460
      %550 = vmatpush1.msra.mxu0 %v459
      %551 = vmatprep.subr.mxu0 %v381
      %552 = vmatpush1.msra.mxu0 %v380
      %553 = vmatprep.subr.mxu0 %v473
      %554 = vmatpush1.msra.mxu0 %v472
      %555 = vmatprep.subr.mxu0 %v486
      %556 = vmatpush1.msra.mxu0 %v485
      %557 = vmatprep.subr.mxu0 %v519
      %558 = vmatpush1.msra.mxu0 %v518
      %559 = vmatprep.subr.mxu0 %v499
      %560 = vmatpush1.msra.mxu0 %v498
      %561 = vmatprep.subr.mxu0 0.0
      %562 = vmatpush1.msra.mxu0 0.0
      %563 = vmatprep.subr.mxu0 0.0
      %564 = vmatpush1.msra.mxu0 0.0
      %565 = vmatprep.subr.mxu0 0.0
      %566 = vmatpush1.msra.mxu0 0.0
      %567 = vmatprep.subr.mxu0 0.0
      %568 = vmatpush1.msra.mxu0 0.0
      %569 = vmatprep.subr.mxu0 0.0
      %570 = vmatpush1.msra.mxu0 0.0
      %571 = vmatprep.subr.mxu0 0.0
      %572 = vmatpush1.msra.mxu0 0.0
      %573 = vmatprep.subr.mxu0 0.0
      %574 = vmatpush1.msra.mxu0 0.0
      %575 = vmatprep.subr.mxu0 0.0
      %576 = vmatpush1.msra.mxu0 0.0
      %577 = vmatprep.subr.mxu0 0.0
      %578 = vmatpush1.msra.mxu0 0.0
      %579 = vmatprep.subr.mxu0 0.0
      %580 = vmatpush1.msra.mxu0 0.0
      %581 = vmatprep.subr.mxu0 0.0
      %582 = vmatpush1.msra.mxu0 0.0
      %583 = vmatprep.subr.mxu0 0.0
      %584 = vmatpush1.msra.mxu0 0.0
      %585 = vmatprep.subr.mxu0 0.0
      %586 = vmatpush1.msra.mxu0 0.0
      %587 = vmatprep.subr.mxu0 0.0
      %588 = vmatpush1.msra.mxu0 0.0
      %589 = vmatprep.subr.mxu0 0.0
      %590 = vmatpush1.msra.mxu0 0.0
      %591 = vmatprep.subr.mxu0 0.0
      %592 = vmatpush1.msra.mxu0 0.0
      %593 = vmatprep.subr.mxu0 0.0
      %594 = vmatpush1.msra.mxu0 0.0
      %595 = vmatprep.subr.mxu0 0.0
      %596 = vmatpush1.msra.mxu0 0.0
      %597 = vmatprep.subr.mxu0 0.0
      %598 = vmatpush1.msra.mxu0 0.0
      %599 = vmatprep.subr.mxu0 0.0
      %600 = vmatpush1.msra.mxu0 0.0
      %601 = vmatprep.subr.mxu0 0.0
      %602 = vmatpush1.msra.mxu0 0.0
      %603 = vmatprep.subr.mxu0 0.0
      %604 = vmatpush1.msra.mxu0 0.0
      %605 = vmatprep.subr.mxu0 0.0
      %606 = vmatpush1.msra.mxu0 0.0
      %607 = vmatprep.mubr.f32.mxu0 0.0
      %608 = vmatmul.mubr.f32.gmra.mrb[0].mxu0 %v538
      %v609 = vpop.f32.mrb[0].mxu0
      %v610 = vadd.f32 %v529, %v609
      %v611 = vpop.f32.mrb[0].mxu0
      %v612 = vadd.f32 %v529, %v611
      %613 = vmatprep.mubr.f32.mxu0 0.0
      %614 = vmatmul.mubr.f32.gmra.mrb[0].mxu0 %v541
      %v615 = vpop.f32.mrb[0].mxu0
      %v616 = vadd.f32 %v534, %v615
      %v617 = vpop.f32.mrb[0].mxu0
      %v618 = vadd.f32 %v534, %v617
      %619 = vdwg.mxu0
      %v620 = vmax.f32 %v610, 0.0
      %v621 = vmax.f32 %v612, 0.0
      %v622 = vmax.f32 %v616, 0.0
      %v623 = vmax.f32 %v618, 0.0
      %624 = vst [vmem:[%s251] sm:$0xff] %v620
      %625 = vst [vmem:[%s251 + $0x8] sm:$0xff] %v621
      %626 = vst [vmem:[%s251 + $0x10] sm:$0xff] %v622
      %627 = vst [vmem:[%s251 + $0x18] sm:$0xff] %v623
      %p628 = scmp.lt.s32.totalorder %s17, 1
      %s629 = scalar_select %p628, %s17, 1
      %s630 = smul.addr %s629, 4
      %s631 = smul.addr %s630, 8
      %s632 = scalar_lea.vmem %s6, %s631
      // Predicated region
      $region45: #{conv_block_forward.1} parent=43 // pred_check
        %p633 = pneg %p166
      $region46: #{conv_block_forward.1} parent=43 // pred_check_branch
        %635 = sbr.rel (%p633) target = $region48
      $region47: #{conv_block_forward.1} parent=43 // pred_region
        _
      $region48: #{conv_block_forward.1} parent=43 // pred_fallthru
        _
    $region44: #{conv_block_forward.1} parent=5 // pred_fallthru
      _
    %p636 = scmp.le.s32.totalorder 2, %s12
    // Predicated region
    $region49: #{conv_block_forward.1} parent=5 // pred_check
      %p637 = pneg %p636
    $region50: #{conv_block_forward.1} parent=5 // pred_check_branch
      %639 = sbr.rel (%p637) target = $region52
    $region51: #{conv_block_forward.1} parent=5 // pred_region
      %s640 = ssub.s32 %s12, 2
      // Predicated region
      $region53: #{conv_block_forward.1} parent=51 // pred_check
        %p641 = pneg %p172
      $region54: #{conv_block_forward.1} parent=51 // pred_check_branch
        %643 = sbr.rel (%p641) target = $region56
      $region55: #{conv_block_forward.1} parent=51 // pred_region
        %p644 = scmp.lt.s32.totalorder %s18, 1
        %s645 = scalar_select %p644, %s18, 1
        %s646 = smul.addr %s645, 4
        %s647 = smul.addr %s646, 8
        %s648 = scalar_lea.vmem %s6, %s647
      $region56: #{conv_block_forward.1} parent=51 // pred_fallthru
        _
    $region52: #{conv_block_forward.1} parent=5 // pred_fallthru
      _
  $region6: #{conv_block_forward.1} parent=0 // loop_footer
    %s16 = sadd.s32 1, %s12
  $region7: #{conv_block_forward.1} parent=0 // loop_footer_branch
    %11 = sbr.rel target = $region3
  $region8: #{conv_block_forward.1} parent=0 // loop_exit
    _

</llo_original>
